<compile_context>
chip_gen: v5e
topology: v5e:2x2
jax: 0.10.0
libtpu: 0.0.40
codegen_flags: <defaults>
</compile_context>

<pallas_src>
import math

import jax
import jax.numpy as jnp
from jax.experimental import pallas as pl
from jax.experimental.pallas import tpu as pltpu


_TM_MAX = 2048                 # max logical rows per grid step
_MIN_ROWS_FOR_PALLAS = 1024    # below this, plain jnp (launch overhead dominates)


def _round_up(x, n):
    return ((x + n - 1) // n) * n


def _pack_factor(c_in, c_out):
    """How many logical rows are packed into one 128-lane output row (1 = none)."""
    if 0 < c_out < 128 and 128 % c_out == 0:
        p = 128 // c_out
        if p * c_in <= 1024:   # keep the block-diagonal K dim small
            return p
    return 1


def _fused_linear_kernel(xv_ref, xa_ref, wv_ref, wa_ref, bv_ref, ba_ref,
                         ov_ref, oa_ref):
    """One grid step: both linears on a tile of rows; weights stay resident."""
    ov = jnp.dot(xv_ref[...], wv_ref[...], preferred_element_type=jnp.float32)
    ov_ref[...] = (ov + bv_ref[...]).astype(ov_ref.dtype)
    oa = jnp.dot(xa_ref[...], wa_ref[...], preferred_element_type=jnp.float32)
    oa_ref[...] = (oa + ba_ref[...]).astype(oa_ref.dtype)


def initial_block_forward(video, audio, params):
    """Fused forward of InitialBlock_cell.

    video: (..., Vin), audio: (..., Ain) with identical leading dims.
    Returns (video_out, audio_out) with the true output channel counts.
    """
    lead = video.shape[:-1]
    assert audio.shape[:-1] == lead, "video/audio leading dims must match"
    vin, ain = video.shape[-1], audio.shape[-1]
    vout, aout = params["video_out"], params["audio_out"]
    m = math.prod(lead) if lead else 1

    # ---- tiny-problem fast path: skip the launch, let XLA fuse it ----------
    if m < _MIN_ROWS_FOR_PALLAS:
        v = video @ params["wv_t"] + params["bv"]
        a = audio @ params["wa_t"] + params["ba"]
        return v, a

    xv = video.reshape(m, vin)
    xa = audio.reshape(m, ain)

    # ---- per-stream row packing (free contiguous reshapes) -----------------
    pv = params["pv"] if m % params["pv"] == 0 else 1
    pa = params["pa"] if m % params["pa"] == 0 else 1
    wv_k, bv_k = ((params["wv_pack"], params["bv_pack"]) if pv > 1
                  else (params["wv_t"], params["bv_row"]))
    wa_k, ba_k = ((params["wa_pack"], params["ba_pack"]) if pa > 1
                  else (params["wa_t"], params["ba_row"]))
    kv, nv = vin * pv, vout * pv          # packed K / N (video)
    ka, na = ain * pa, aout * pa          # packed K / N (audio)
    xv_k = xv.reshape(m // pv, kv)
    xa_k = xa.reshape(m // pa, ka)

    # ---- tile the (logical) row axis ----------------------------------------
    # Blocks stay multiples of 8 sublanes for both packed streams; at least
    # 2 grid steps so both v7x TensorCores get a share of the work.
    quantum = 8 * math.lcm(pv, pa)
    tm = max(quantum, min(_TM_MAX, _round_up(pl.cdiv(m, 2), quantum)))
    grid = (pl.cdiv(m, tm),)

    bytes_el = video.dtype.itemsize
    cost = pl.CostEstimate(
        flops=int(2 * m * (vin * vout + ain * aout)),
        transcendentals=0,
        bytes_accessed=int(bytes_el * (m * (vin + ain + vout + aout)
                                       + kv * nv + ka * na + nv + na)),
    )

    ov, oa = pl.pallas_call(
        _fused_linear_kernel,
        out_shape=(
            jax.ShapeDtypeStruct((m // pv, nv), video.dtype),
            jax.ShapeDtypeStruct((m // pa, na), audio.dtype),
        ),
        grid=grid,
        in_specs=[
            pl.BlockSpec((tm // pv, kv), lambda i: (i, 0)),   # video rows (tiled)
            pl.BlockSpec((tm // pa, ka), lambda i: (i, 0)),   # audio rows (tiled)
            pl.BlockSpec((kv, nv), lambda i: (0, 0)),         # video weight (resident)
            pl.BlockSpec((ka, na), lambda i: (0, 0)),         # audio weight (resident)
            pl.BlockSpec((1, nv), lambda i: (0, 0)),          # video bias
            pl.BlockSpec((1, na), lambda i: (0, 0)),          # audio bias
        ],
        out_specs=(
            pl.BlockSpec((tm // pv, nv), lambda i: (i, 0)),
            pl.BlockSpec((tm // pa, na), lambda i: (i, 0)),
        ),
        compiler_params=pltpu.CompilerParams(
            dimension_semantics=("parallel",)),
        cost_estimate=cost,
    )(xv_k, xa_k, wv_k, wa_k, bv_k, ba_k)

    # Un-packing is a free contiguous reshape (no extra HBM pass, no slicing).
    return ov.reshape(*lead, vout), oa.reshape(*lead, aout)


class InitialBlockCell:
    """JAX/Pallas port of InitialBlock_cell: two independent Linear layers,
    executed as one fused Pallas kernel."""

    def __init__(self, key, video_in, audio_in, video_out, audio_out,
                 feature_dim, kernel_size=3, dtype=jnp.float32):
        # feature_dim / kernel_size are accepted but unused, matching CellConv.
        kv_w, kv_b, ka_w, ka_b = jax.random.split(key, 4)
        bnd_v = 1.0 / math.sqrt(video_in)
        bnd_a = 1.0 / math.sqrt(audio_in)

        # PyTorch-layout parameters (reference / export).
        self.video_w = jax.random.uniform(kv_w, (video_out, video_in), dtype,
                                          minval=-bnd_v, maxval=bnd_v)
        self.video_b = jax.random.uniform(kv_b, (video_out,), dtype,
                                          minval=-bnd_v, maxval=bnd_v)
        self.audio_w = jax.random.uniform(ka_w, (audio_out, audio_in), dtype,
                                          minval=-bnd_a, maxval=bnd_a)
        self.audio_b = jax.random.uniform(ka_b, (audio_out,), dtype,
                                          minval=-bnd_a, maxval=bnd_a)

        pv = _pack_factor(video_in, video_out)
        pa = _pack_factor(audio_in, audio_out)
        wv_t = self.video_w.T                       # (Vin, Vout)
        wa_t = self.audio_w.T                       # (Ain, Aout)

        self.params = dict(
            video_out=video_out, audio_out=audio_out, pv=pv, pa=pa,
            wv_t=wv_t, bv=self.video_b, bv_row=self.video_b[None, :],
            wa_t=wa_t, ba=self.audio_b, ba_row=self.audio_b[None, :],
            # Block-diagonal packed weights: p logical rows -> one 128-lane row.
            wv_pack=(jnp.kron(jnp.eye(pv, dtype=dtype), wv_t) if pv > 1 else wv_t),
            bv_pack=(jnp.tile(self.video_b, pv)[None, :] if pv > 1
                     else self.video_b[None, :]),
            wa_pack=(jnp.kron(jnp.eye(pa, dtype=dtype), wa_t) if pa > 1 else wa_t),
            ba_pack=(jnp.tile(self.audio_b, pa)[None, :] if pa > 1
                     else self.audio_b[None, :]),
        )

    def __call__(self, video, audio):
        return initial_block_forward(video, audio, self.params)


if __name__ == "__main__":
    key = jax.random.PRNGKey(0)
    k_params, k_video, k_audio, k_v2, k_a2 = jax.random.split(key, 5)

    video_in, video_out = 4, 32
    audio_in, audio_out = 6, 16
    feature_dim = 16

    block = InitialBlockCell(k_params, video_in, audio_in,
                             video_out, audio_out, feature_dim)

    # 1) Main check: large enough to take the packed Pallas path (grid of 2).
    batch, seq = 4, 512            # m = 2048
    video = jax.random.normal(k_video, (batch, seq, video_in), jnp.float32)
    audio = jax.random.normal(k_audio, (batch, seq, audio_in), jnp.float32)
    v_out, a_out = block(video, audio)
    jax.block_until_ready((v_out, a_out))

    v_ref = video @ block.video_w.T + block.video_b
    a_ref = audio @ block.audio_w.T + block.audio_b
    assert v_out.shape == (batch, seq, video_out)
    assert a_out.shape == (batch, seq, audio_out)
    assert jnp.allclose(v_out, v_ref, atol=1e-5), "video mismatch (packed path)"
    assert jnp.allclose(a_out, a_ref, atol=1e-5), "audio mismatch (packed path)"

    # 2) Ragged-m check: m = 2100 (not a multiple of 8) -> audio uses the
    #    unpacked fallback, last grid tile is ragged and masked by Pallas.
    batch2, seq2 = 3, 700
    video2 = jax.random.normal(k_v2, (batch2, seq2, video_in), jnp.float32)
    audio2 = jax.random.normal(k_a2, (batch2, seq2, audio_in), jnp.float32)
    v2, a2 = block(video2, audio2)
    jax.block_until_ready((v2, a2))
    assert jnp.allclose(v2, video2 @ block.video_w.T + block.video_b,
                        atol=1e-5), "video mismatch (ragged path)"
    assert jnp.allclose(a2, audio2 @ block.audio_w.T + block.audio_b,
                        atol=1e-5), "audio mismatch (ragged path)"

    # 3) Tiny-m check exercises the plain-jnp fast path.
    v3, a3 = block(video[:, :8], audio[:, :8])
    jax.block_until_ready((v3, a3))
    assert jnp.allclose(v3, video[:, :8] @ block.video_w.T + block.video_b,
                        atol=1e-5), "video mismatch (fast path)"
    assert jnp.allclose(a3, audio[:, :8] @ block.audio_w.T + block.audio_b,
                        atol=1e-5), "audio mismatch (fast path)"

    print("KERNEL_OK")
</pallas_src>

<mosaic_0001>
module attributes {stable_mosaic.version = 11 : i64} {
  func.func @_fused_linear_kernel(%arg0: i32, %arg1: memref<256x16xf32, #tpu.memory_space<vmem>>, %arg2: memref<128x48xf32, #tpu.memory_space<vmem>>, %arg3: memref<16x128xf32, #tpu.memory_space<vmem>>, %arg4: memref<48x128xf32, #tpu.memory_space<vmem>>, %arg5: memref<1x128xf32, #tpu.memory_space<vmem>>, %arg6: memref<1x128xf32, #tpu.memory_space<vmem>>, %arg7: memref<256x128xf32, #tpu.memory_space<vmem>>, %arg8: memref<128x128xf32, #tpu.memory_space<vmem>>) attributes {dimension_semantics = [#tpu.dimension_semantics<parallel>], iteration_bounds = array<i64: 2>, scalar_prefetch = 0 : i64, scratch_operands = 0 : i64, tpu.core_type = #tpu.core_type<tc>, window_params = [{transform_indices = @transform_0, window_bounds = array<i64: 256, 16>}, {transform_indices = @transform_1, window_bounds = array<i64: 128, 48>}, {pipeline_mode = #tpu.pipeline_mode<synchronous>, transform_indices = @transform_2, window_bounds = array<i64: 16, 128>}, {pipeline_mode = #tpu.pipeline_mode<synchronous>, transform_indices = @transform_3, window_bounds = array<i64: 48, 128>}, {pipeline_mode = #tpu.pipeline_mode<synchronous>, transform_indices = @transform_4, window_bounds = array<i64: 1, 128>}, {pipeline_mode = #tpu.pipeline_mode<synchronous>, transform_indices = @transform_5, window_bounds = array<i64: 1, 128>}, {transform_indices = @transform_6, window_bounds = array<i64: 256, 128>}, {transform_indices = @transform_7, window_bounds = array<i64: 128, 128>}]} {
    %c0 = arith.constant 0 : index
    %c0_0 = arith.constant 0 : index
    %0 = vector.load %arg1[%c0, %c0_0] : memref<256x16xf32, #tpu.memory_space<vmem>>, vector<256x16xf32>
    %c0_1 = arith.constant 0 : index
    %c0_2 = arith.constant 0 : index
    %1 = vector.load %arg3[%c0_1, %c0_2] : memref<16x128xf32, #tpu.memory_space<vmem>>, vector<16x128xf32>
    %cst = arith.constant dense<0.000000e+00> : vector<256x128xf32>
    %2 = tpu.matmul %0, %1, %cst {dimension_numbers = #tpu.dot_dimension_numbers<[1], [0], [0], [1], [0, 0, 1, 1], [], []>} : vector<256x16xf32>, vector<16x128xf32>, vector<256x128xf32> -> vector<256x128xf32>
    %c0_3 = arith.constant 0 : index
    %c0_4 = arith.constant 0 : index
    %3 = vector.load %arg5[%c0_3, %c0_4] : memref<1x128xf32, #tpu.memory_space<vmem>>, vector<1x128xf32>
    %4 = vector.broadcast %3 : vector<1x128xf32> to vector<256x128xf32>
    %5 = arith.addf %2, %4 : vector<256x128xf32>
    %c0_5 = arith.constant 0 : index
    %c0_6 = arith.constant 0 : index
    %6 = vector.load %arg7[%c0_5, %c0_6] : memref<256x128xf32, #tpu.memory_space<vmem>>, vector<256x128xf32>
    tpu.vector_store %arg7[%c0_5, %c0_6], %5 {strides = array<i32>} : memref<256x128xf32, #tpu.memory_space<vmem>>, vector<256x128xf32>,
    %c0_7 = arith.constant 0 : index
    %c0_8 = arith.constant 0 : index
    %7 = vector.load %arg2[%c0_7, %c0_8] : memref<128x48xf32, #tpu.memory_space<vmem>>, vector<128x48xf32>
    %c0_9 = arith.constant 0 : index
    %c0_10 = arith.constant 0 : index
    %8 = vector.load %arg4[%c0_9, %c0_10] : memref<48x128xf32, #tpu.memory_space<vmem>>, vector<48x128xf32>
    %cst_11 = arith.constant dense<0.000000e+00> : vector<128x128xf32>
    %9 = tpu.matmul %7, %8, %cst_11 {dimension_numbers = #tpu.dot_dimension_numbers<[1], [0], [0], [1], [0, 0, 1, 1], [], []>} : vector<128x48xf32>, vector<48x128xf32>, vector<128x128xf32> -> vector<128x128xf32>
    %c0_12 = arith.constant 0 : index
    %c0_13 = arith.constant 0 : index
    %10 = vector.load %arg6[%c0_12, %c0_13] : memref<1x128xf32, #tpu.memory_space<vmem>>, vector<1x128xf32>
    %11 = vector.broadcast %10 : vector<1x128xf32> to vector<128x128xf32>
    %12 = arith.addf %9, %11 : vector<128x128xf32>
    %c0_14 = arith.constant 0 : index
    %c0_15 = arith.constant 0 : index
    %13 = vector.load %arg8[%c0_14, %c0_15] : memref<128x128xf32, #tpu.memory_space<vmem>>, vector<128x128xf32>
    tpu.vector_store %arg8[%c0_14, %c0_15], %12 {strides = array<i32>} : memref<128x128xf32, #tpu.memory_space<vmem>>, vector<128x128xf32>,
    return
  }
  func.func @transform_0(%arg0: i32) -> (i32, i32) {
    %c0_i32 = arith.constant 0 : i32
    %c0_i32_0 = arith.constant 0 : i32
    return %arg0, %c0_i32 : i32, i32
  }
  func.func @transform_1(%arg0: i32) -> (i32, i32) {
    %c0_i32 = arith.constant 0 : i32
    %c0_i32_0 = arith.constant 0 : i32
    return %arg0, %c0_i32 : i32, i32
  }
  func.func @transform_2(%arg0: i32) -> (i32, i32) {
    %c0_i32 = arith.constant 0 : i32
    %c0_i32_0 = arith.constant 0 : i32
    %c0_i32_1 = arith.constant 0 : i32
    return %c0_i32, %c0_i32_0 : i32, i32
  }
  func.func @transform_3(%arg0: i32) -> (i32, i32) {
    %c0_i32 = arith.constant 0 : i32
    %c0_i32_0 = arith.constant 0 : i32
    %c0_i32_1 = arith.constant 0 : i32
    return %c0_i32, %c0_i32_0 : i32, i32
  }
  func.func @transform_4(%arg0: i32) -> (i32, i32) {
    %c0_i32 = arith.constant 0 : i32
    %c0_i32_0 = arith.constant 0 : i32
    %c0_i32_1 = arith.constant 0 : i32
    return %c0_i32, %c0_i32_0 : i32, i32
  }
  func.func @transform_5(%arg0: i32) -> (i32, i32) {
    %c0_i32 = arith.constant 0 : i32
    %c0_i32_0 = arith.constant 0 : i32
    %c0_i32_1 = arith.constant 0 : i32
    return %c0_i32, %c0_i32_0 : i32, i32
  }
  func.func @transform_6(%arg0: i32) -> (i32, i32) {
    %c0_i32 = arith.constant 0 : i32
    %c0_i32_0 = arith.constant 0 : i32
    return %arg0, %c0_i32 : i32, i32
  }
  func.func @transform_7(%arg0: i32) -> (i32, i32) {
    %c0_i32 = arith.constant 0 : i32
    %c0_i32_0 = arith.constant 0 : i32
    return %arg0, %c0_i32 : i32, i32
  }
}

</mosaic_0001>

<llo_original>
// kernel: tpu_custom_call.1
$region0: #{tpu_custom_call.1}
  #allocation0 [shape = 'u32[]', space=smem, size = 0x4, offset = 0x4, fixed_abs, tag = 'smem constant byte address 0x4 - core index']
  #allocation1 [shape = 'u32[72,128]{1,0:T(1,128)}', space=vmem, size = 0x9000, scoped, tag = 'internal scratch']
  %s0 = inlined_call_operand.vmem [shape: f32[512,16], index: 0, kind: input, shape index: {}]
  %s1 = inlined_call_operand.vmem [shape: f32[256,48], index: 1, kind: input, shape index: {}]
  %s2 = inlined_call_operand.vmem [shape: f32[16,128], index: 2, kind: input, shape index: {}]
  %s3 = inlined_call_operand.vmem [shape: f32[48,128], index: 3, kind: input, shape index: {}]
  %s4 = inlined_call_operand.vmem [shape: f32[1,128], index: 4, kind: input, shape index: {}]
  %s5 = inlined_call_operand.vmem [shape: f32[1,128], index: 5, kind: input, shape index: {}]
  %s6 = inlined_call_operand.hbm [shape: f32[512,128], index: 6, kind: output, shape index: {0}]
  %s7 = inlined_call_operand.hbm [shape: f32[256,128], index: 7, kind: output, shape index: {1}]
  %8 = xla_tuple %s6, %s7
  %s9 = sld [smem:[#allocation0]]
  $region65: #{tpu_custom_call.1} parent=0
    _
  %s11 = ssub.s32 1, %s9
  %s12 = scalar_select 0, %s11, %s9
  $region1: #{tpu_custom_call.1} parent=0
    #allocation2 [shape = 'u8[262144]{0}', space=vmem, size = 0x40000, scoped, tag = 'output window, operand 0']
    #allocation3 [shape = 's32[2]{0}', space=sflag, size = 0x8, scoped, tag = 'scoped memory for tpu_custom_call.1']
    #allocation4 [shape = 'u8[131072]{0}', space=vmem, size = 0x20000, scoped, tag = 'output window, operand 1']
    #allocation5 [shape = 's32[2]{0}', space=sflag, size = 0x8, scoped, tag = 'scoped memory for tpu_custom_call.1']
    %13 = vsyncpa [#allocation3], 0
    %s14 = scalar_lea.sflag [#allocation3], 1
    %15 = vsyncpa %s14, 0
    %16 = vsyncpa [#allocation5], 0
    %s17 = scalar_lea.sflag [#allocation5], 1
    %18 = vsyncpa %s17, 0
    loop: start=0, step=1, limit=4
    $region2: #{tpu_custom_call.1} parent=1 // loop_pre_header
      _
    $region3: #{tpu_custom_call.1} parent=1 // loop_header
      %s20 = sphi 0, %s24
      %p21 = scmp.ge.s32.totalorder %s20, 4
      %s30 = sphi 0, %s32
      %s33 = sphi 0, %s30
      %s34 = sphi 0, %s33
      %s50 = sphi 0, %s34
      %s56 = sphi 0, %s58
      %s59 = sphi 0, %s56
      %s60 = sphi 0, %s59
      %s76 = sphi 0, %s60
      %s80 = sphi 0, %s80
      %s82 = sphi 0, %s80
      %s83 = sphi 0, %s82
      %s97 = sphi 0, %s83
      %s101 = sphi 0, %s101
      %s103 = sphi 0, %s101
      %s104 = sphi 0, %s103
      %s118 = sphi 0, %s104
      %s122 = sphi 0, %s122
      %s124 = sphi 0, %s122
      %s125 = sphi 0, %s124
      %s139 = sphi 0, %s125
      %s143 = sphi 0, %s143
      %s145 = sphi 0, %s143
      %s146 = sphi 0, %s145
      %s160 = sphi 0, %s146
      %s166 = sphi 0, %s168
      %s169 = sphi 0, %s166
      %s170 = sphi 0, %s169
      %s186 = sphi 0, %s170
      %s192 = sphi 0, %s194
      %s195 = sphi 0, %s192
      %s196 = sphi 0, %s195
      %s212 = sphi 0, %s196
    $region4: #{tpu_custom_call.1} parent=1 // loop_header_branch
      %23 = sbr.rel (%p21) target = $region8
    $region5: #{tpu_custom_call.1} parent=1 // loop_body
      %s25 = ssub.s32 %s20, 1
      %s26 = ssub.s32 %s20, 2
      %s27 = sadd.s32 %s20, 1
      %s28 = ssub.s32 %s20, %s27
      %p29 = scmp.eq.s32.totalorder %s28, 0
      %s31 = sadd.s32 %s30, 1
      %s32 = scalar_select %p29, %s30, %s31
      %p35 = pneg %p29
      %p36 = scmp.eq.s32.totalorder %s20, 1
      %p37 = por %p35, %p36
      %p38 = scmp.ne.s32.totalorder %s30, %s33
      %p39 = scmp.eq.s32.totalorder %s20, 0
      %p40 = por %p38, %p39
      %p41 = scmp.ne.s32.totalorder %s30, %s33
      %p42 = scmp.eq.s32.totalorder %s25, 1
      %p43 = por %p41, %p42
      %p44 = scmp.ne.s32.totalorder %s33, %s34
      %p45 = scmp.eq.s32.totalorder %s25, 0
      %p46 = por %p44, %p45
      %p47 = scmp.ne.s32.totalorder %s33, %s34
      %p48 = scmp.eq.s32.totalorder %s26, 1
      %p49 = por %p47, %p48
      %p51 = scmp.ne.s32.totalorder %s34, %s50
      %p52 = scmp.eq.s32.totalorder %s26, 0
      %p53 = por %p51, %p52
      %s54 = ssub.s32 %s20, %s27
      %p55 = scmp.eq.s32.totalorder %s54, 0
      %s57 = sadd.s32 %s56, 1
      %s58 = scalar_select %p55, %s56, %s57
      %p61 = pneg %p55
      %p62 = scmp.eq.s32.totalorder %s20, 1
      %p63 = por %p61, %p62
      %p64 = scmp.ne.s32.totalorder %s56, %s59
      %p65 = scmp.eq.s32.totalorder %s20, 0
      %p66 = por %p64, %p65
      %p67 = scmp.ne.s32.totalorder %s56, %s59
      %p68 = scmp.eq.s32.totalorder %s25, 1
      %p69 = por %p67, %p68
      %p70 = scmp.ne.s32.totalorder %s59, %s60
      %p71 = scmp.eq.s32.totalorder %s25, 0
      %p72 = por %p70, %p71
      %p73 = scmp.ne.s32.totalorder %s59, %s60
      %p74 = scmp.eq.s32.totalorder %s26, 1
      %p75 = por %p73, %p74
      %p77 = scmp.ne.s32.totalorder %s60, %s76
      %p78 = scmp.eq.s32.totalorder %s26, 0
      %p79 = por %p77, %p78
      %s81 = sadd.s32 %s80, 1
      %p84 = scmp.eq.s32.totalorder %s20, 1
      %p85 = scmp.ne.s32.totalorder %s80, %s82
      %p86 = scmp.eq.s32.totalorder %s20, 0
      %p87 = por %p85, %p86
      %p88 = scmp.ne.s32.totalorder %s80, %s82
      %p89 = scmp.eq.s32.totalorder %s25, 1
      %p90 = por %p88, %p89
      %p91 = scmp.ne.s32.totalorder %s82, %s83
      %p92 = scmp.eq.s32.totalorder %s25, 0
      %p93 = por %p91, %p92
      %p94 = scmp.ne.s32.totalorder %s82, %s83
      %p95 = scmp.eq.s32.totalorder %s26, 1
      %p96 = por %p94, %p95
      %p98 = scmp.ne.s32.totalorder %s83, %s97
      %p99 = scmp.eq.s32.totalorder %s26, 0
      %p100 = por %p98, %p99
      %s102 = sadd.s32 %s101, 1
      %p105 = scmp.eq.s32.totalorder %s20, 1
      %p106 = scmp.ne.s32.totalorder %s101, %s103
      %p107 = scmp.eq.s32.totalorder %s20, 0
      %p108 = por %p106, %p107
      %p109 = scmp.ne.s32.totalorder %s101, %s103
      %p110 = scmp.eq.s32.totalorder %s25, 1
      %p111 = por %p109, %p110
      %p112 = scmp.ne.s32.totalorder %s103, %s104
      %p113 = scmp.eq.s32.totalorder %s25, 0
      %p114 = por %p112, %p113
      %p115 = scmp.ne.s32.totalorder %s103, %s104
      %p116 = scmp.eq.s32.totalorder %s26, 1
      %p117 = por %p115, %p116
      %p119 = scmp.ne.s32.totalorder %s104, %s118
      %p120 = scmp.eq.s32.totalorder %s26, 0
      %p121 = por %p119, %p120
      %s123 = sadd.s32 %s122, 1
      %p126 = scmp.eq.s32.totalorder %s20, 1
      %p127 = scmp.ne.s32.totalorder %s122, %s124
      %p128 = scmp.eq.s32.totalorder %s20, 0
      %p129 = por %p127, %p128
      %p130 = scmp.ne.s32.totalorder %s122, %s124
      %p131 = scmp.eq.s32.totalorder %s25, 1
      %p132 = por %p130, %p131
      %p133 = scmp.ne.s32.totalorder %s124, %s125
      %p134 = scmp.eq.s32.totalorder %s25, 0
      %p135 = por %p133, %p134
      %p136 = scmp.ne.s32.totalorder %s124, %s125
      %p137 = scmp.eq.s32.totalorder %s26, 1
      %p138 = por %p136, %p137
      %p140 = scmp.ne.s32.totalorder %s125, %s139
      %p141 = scmp.eq.s32.totalorder %s26, 0
      %p142 = por %p140, %p141
      %s144 = sadd.s32 %s143, 1
      %p147 = scmp.eq.s32.totalorder %s20, 1
      %p148 = scmp.ne.s32.totalorder %s143, %s145
      %p149 = scmp.eq.s32.totalorder %s20, 0
      %p150 = por %p148, %p149
      %p151 = scmp.ne.s32.totalorder %s143, %s145
      %p152 = scmp.eq.s32.totalorder %s25, 1
      %p153 = por %p151, %p152
      %p154 = scmp.ne.s32.totalorder %s145, %s146
      %p155 = scmp.eq.s32.totalorder %s25, 0
      %p156 = por %p154, %p155
      %p157 = scmp.ne.s32.totalorder %s145, %s146
      %p158 = scmp.eq.s32.totalorder %s26, 1
      %p159 = por %p157, %p158
      %p161 = scmp.ne.s32.totalorder %s146, %s160
      %p162 = scmp.eq.s32.totalorder %s26, 0
      %p163 = por %p161, %p162
      %s164 = ssub.s32 %s20, %s27
      %p165 = scmp.eq.s32.totalorder %s164, 0
      %s167 = sadd.s32 %s166, 1
      %s168 = scalar_select %p165, %s166, %s167
      %p171 = pneg %p165
      %p172 = scmp.eq.s32.totalorder %s20, 1
      %p173 = por %p171, %p172
      %p174 = scmp.ne.s32.totalorder %s166, %s169
      %p175 = scmp.eq.s32.totalorder %s20, 0
      %p176 = por %p174, %p175
      %p177 = scmp.ne.s32.totalorder %s166, %s169
      %p178 = scmp.eq.s32.totalorder %s25, 1
      %p179 = por %p177, %p178
      %p180 = scmp.ne.s32.totalorder %s169, %s170
      %p181 = scmp.eq.s32.totalorder %s25, 0
      %p182 = por %p180, %p181
      %p183 = scmp.ne.s32.totalorder %s169, %s170
      %p184 = scmp.eq.s32.totalorder %s26, 1
      %p185 = por %p183, %p184
      %p187 = scmp.ne.s32.totalorder %s170, %s186
      %p188 = scmp.eq.s32.totalorder %s26, 0
      %p189 = por %p187, %p188
      %s190 = ssub.s32 %s20, %s27
      %p191 = scmp.eq.s32.totalorder %s190, 0
      %s193 = sadd.s32 %s192, 1
      %s194 = scalar_select %p191, %s192, %s193
      %p197 = pneg %p191
      %p198 = scmp.eq.s32.totalorder %s20, 1
      %p199 = por %p197, %p198
      %p200 = scmp.ne.s32.totalorder %s192, %s195
      %p201 = scmp.eq.s32.totalorder %s20, 0
      %p202 = por %p200, %p201
      %p203 = scmp.ne.s32.totalorder %s192, %s195
      %p204 = scmp.eq.s32.totalorder %s25, 1
      %p205 = por %p203, %p204
      %p206 = scmp.ne.s32.totalorder %s195, %s196
      %p207 = scmp.eq.s32.totalorder %s25, 0
      %p208 = por %p206, %p207
      %p209 = scmp.ne.s32.totalorder %s195, %s196
      %p210 = scmp.eq.s32.totalorder %s26, 1
      %p211 = por %p209, %p210
      %p213 = scmp.ne.s32.totalorder %s196, %s212
      %p214 = scmp.eq.s32.totalorder %s26, 0
      %p215 = por %p213, %p214
      %p216 = scmp.le.s32.totalorder 1, %s20
      %p217 = scmp.lt.s32.totalorder %s20, 3
      %p218 = pnand %p216, %p217
      %p219 = pneg %p218
      // Predicated region
      $region9: #{tpu_custom_call.1} parent=5 // pred_check
        _
      $region10: #{tpu_custom_call.1} parent=5 // pred_check_branch
        %221 = sbr.rel (%p218) target = $region12
      $region11: #{tpu_custom_call.1} parent=5 // pred_region
        %s222 = ssub.s32 %s20, 1
        // Predicated region
        $region13: #{tpu_custom_call.1} parent=11 // pred_check
          %p223 = pneg %p93
        $region14: #{tpu_custom_call.1} parent=11 // pred_check_branch
          %225 = sbr.rel (%p223) target = $region16
        $region15: #{tpu_custom_call.1} parent=11 // pred_region
          _
        $region16: #{tpu_custom_call.1} parent=11 // pred_fallthru
          _
        // Predicated region
        $region17: #{tpu_custom_call.1} parent=11 // pred_check
          %p226 = pneg %p114
        $region18: #{tpu_custom_call.1} parent=11 // pred_check_branch
          %228 = sbr.rel (%p226) target = $region20
        $region19: #{tpu_custom_call.1} parent=11 // pred_region
          _
        $region20: #{tpu_custom_call.1} parent=11 // pred_fallthru
          _
        // Predicated region
        $region21: #{tpu_custom_call.1} parent=11 // pred_check
          %p229 = pneg %p135
        $region22: #{tpu_custom_call.1} parent=11 // pred_check_branch
          %231 = sbr.rel (%p229) target = $region24
        $region23: #{tpu_custom_call.1} parent=11 // pred_region
          _
        $region24: #{tpu_custom_call.1} parent=11 // pred_fallthru
          _
        // Predicated region
        $region25: #{tpu_custom_call.1} parent=11 // pred_check
          %p232 = pneg %p156
        $region26: #{tpu_custom_call.1} parent=11 // pred_check_branch
          %234 = sbr.rel (%p232) target = $region28
        $region27: #{tpu_custom_call.1} parent=11 // pred_region
          _
        $region28: #{tpu_custom_call.1} parent=11 // pred_fallthru
          _
      $region12: #{tpu_custom_call.1} parent=5 // pred_fallthru
        _
      %p235 = scmp.lt.s32.totalorder %s20, 2
      // Predicated region
      $region29: #{tpu_custom_call.1} parent=5 // pred_check
        %p236 = pneg %p235
      $region30: #{tpu_custom_call.1} parent=5 // pred_check_branch
        %238 = sbr.rel (%p236) target = $region32
      $region31: #{tpu_custom_call.1} parent=5 // pred_region
        // Predicated region
        $region33: #{tpu_custom_call.1} parent=31 // pred_check
          %p239 = pneg %p40
        $region34: #{tpu_custom_call.1} parent=31 // pred_check_branch
          %241 = sbr.rel (%p239) target = $region36
        $region35: #{tpu_custom_call.1} parent=31 // pred_region
          %s242 = smul.u32 32, %s20
          %p243 = scmp.lt.s32.totalorder %s242, 63
          %s244 = scalar_select %p243, %s242, 63
          %s245 = smul.addr %s244, 8
          %s246 = scalar_lea.vmem %s0, %s245
          %s247 = smul.u32 32, %s20
        $region36: #{tpu_custom_call.1} parent=31 // pred_fallthru
          _
        // Predicated region
        $region37: #{tpu_custom_call.1} parent=31 // pred_check
          %p248 = pneg %p66
        $region38: #{tpu_custom_call.1} parent=31 // pred_check_branch
          %250 = sbr.rel (%p248) target = $region40
        $region39: #{tpu_custom_call.1} parent=31 // pred_region
          %s251 = smul.u32 16, %s20
          %p252 = scmp.lt.s32.totalorder %s251, 31
          %s253 = scalar_select %p252, %s251, 31
          %s254 = smul.addr %s253, 8
          %s255 = scalar_lea.vmem %s1, %s254
          %s256 = smul.u32 16, %s20
        $region40: #{tpu_custom_call.1} parent=31 // pred_fallthru
          _
      $region32: #{tpu_custom_call.1} parent=5 // pred_fallthru
        _
      %p257 = scmp.le.s32.totalorder 1, %s20
      %p258 = scmp.lt.s32.totalorder %s20, 3
      %p259 = pnand %p257, %p258
      %p260 = pneg %p259
      // Predicated region
      $region41: #{tpu_custom_call.1} parent=5 // pred_check
        _
      $region42: #{tpu_custom_call.1} parent=5 // pred_check_branch
        %262 = sbr.rel (%p259) target = $region44
      $region43: #{tpu_custom_call.1} parent=5 // pred_region
        %s263 = ssub.s32 %s20, 1
        %s264 = smul.u32 32, %s25
        %p265 = scmp.lt.s32.totalorder %s264, 63
        %s266 = scalar_select %p265, %s264, 63
        %s267 = smul.addr %s266, 8
        %s268 = scalar_lea.vmem %s0, %s267
        %p269 = pneg %p46
        %p270 = pneg %p43
        %s271 = smul.u32 16, %s25
        %p272 = scmp.lt.s32.totalorder %s271, 31
        %s273 = scalar_select %p272, %s271, 31
        %s274 = smul.addr %s273, 8
        %s275 = scalar_lea.vmem %s1, %s274
        %p276 = pneg %p72
        %p277 = pneg %p69
        %p278 = pneg %p93
        %p279 = pneg %p90
        %p280 = pneg %p114
        %p281 = pneg %p111
        %p282 = pneg %p135
        %p283 = pneg %p132
        %p284 = pneg %p156
        %p285 = pneg %p153
        %p286 = pneg %p182
        %p287 = pneg %p179
        %s288 = sand.u32 %s169, 1
        %s289 = scalar_lea.sflag [#allocation3], %s288
        %s290 = sand.u32 %s169, 1
        %s291 = smul.addr %s290, 256
        %s292 = scalar_lea.vmem [#allocation2], %s291
        %p293 = pneg %p208
        %p294 = pneg %p205
        %s295 = sand.u32 %s195, 1
        %s296 = scalar_lea.sflag [#allocation5], %s295
        %s297 = sand.u32 %s195, 1
        %s298 = smul.addr %s297, 128
        %s299 = scalar_lea.vmem [#allocation4], %s298
        %s300 = smul.u32 32, %s25
        %p301 = scmp.lt.s32.totalorder %s300, 63
        %s302 = scalar_select %p301, %s300, 63
        %s303 = smul.addr %s302, 8
        %s304 = scalar_lea.vmem %s0, %s303
        %s305 = smul.u32 32, %s25
        %s306 = smul.u32 16, %s25
        %p307 = scmp.lt.s32.totalorder %s306, 31
        %s308 = scalar_select %p307, %s306, 31
        %s309 = smul.addr %s308, 8
        %s310 = scalar_lea.vmem %s1, %s309
        %s311 = smul.u32 16, %s25
        %s312 = smul.u32 32, %s25
        %s313 = smul.u32 16, %s25
        %v314 = vld [vmem:[%s304] sm:$0xff]
        %v315 = vld [vmem:[%s304 + $0x8] sm:$0xff]
        %v316 = vld [vmem:[%s304 + $0x10] sm:$0xff]
        %v317 = vld [vmem:[%s304 + $0x18] sm:$0xff]
        %v318 = vld [vmem:[%s304 + $0x20] sm:$0xff]
        %v319 = vld [vmem:[%s304 + $0x28] sm:$0xff]
        %v320 = vld [vmem:[%s304 + $0x30] sm:$0xff]
        %v321 = vld [vmem:[%s304 + $0x38] sm:$0xff]
        %v322 = vld [vmem:[%s304 + $0x40] sm:$0xff]
        %v323 = vld [vmem:[%s304 + $0x48] sm:$0xff]
        %v324 = vld [vmem:[%s304 + $0x50] sm:$0xff]
        %v325 = vld [vmem:[%s304 + $0x58] sm:$0xff]
        %v326 = vld [vmem:[%s304 + $0x60] sm:$0xff]
        %v327 = vld [vmem:[%s304 + $0x68] sm:$0xff]
        %v328 = vld [vmem:[%s304 + $0x70] sm:$0xff]
        %v329 = vld [vmem:[%s304 + $0x78] sm:$0xff]
        %v330 = vld [vmem:[%s304 + $0x80] sm:$0xff]
        %v331 = vld [vmem:[%s304 + $0x88] sm:$0xff]
        %v332 = vld [vmem:[%s304 + $0x90] sm:$0xff]
        %v333 = vld [vmem:[%s304 + $0x98] sm:$0xff]
        %v334 = vld [vmem:[%s304 + $0xa0] sm:$0xff]
        %v335 = vld [vmem:[%s304 + $0xa8] sm:$0xff]
        %v336 = vld [vmem:[%s304 + $0xb0] sm:$0xff]
        %v337 = vld [vmem:[%s304 + $0xb8] sm:$0xff]
        %v338 = vld [vmem:[%s304 + $0xc0] sm:$0xff]
        %v339 = vld [vmem:[%s304 + $0xc8] sm:$0xff]
        %v340 = vld [vmem:[%s304 + $0xd0] sm:$0xff]
        %v341 = vld [vmem:[%s304 + $0xd8] sm:$0xff]
        %v342 = vld [vmem:[%s304 + $0xe0] sm:$0xff]
        %v343 = vld [vmem:[%s304 + $0xe8] sm:$0xff]
        %v344 = vld [vmem:[%s304 + $0xf0] sm:$0xff]
        %v345 = vld [vmem:[%s304 + $0xf8] sm:$0xff]
        %v346 = vld [vmem:[%s2] sm:$0xff]
        %v347 = vld [vmem:[%s2 + $0x8] sm:$0xff]
        %v348 = vld [vmem:[%s4] sm:$0x1]
        %v350 = vperm.slane %v348, 0
        %vm352 = vcmask 130048
        %v354 = vsel %vm352, %v314, 0
        %v357 = vsel %vm352, %v315, 0
        %v360 = vsel %vm352, %v316, 0
        %v363 = vsel %vm352, %v317, 0
        %v366 = vsel %vm352, %v318, 0
        %v369 = vsel %vm352, %v319, 0
        %v372 = vsel %vm352, %v320, 0
        %v375 = vsel %vm352, %v321, 0
        %v378 = vsel %vm352, %v322, 0
        %v381 = vsel %vm352, %v323, 0
        %v384 = vsel %vm352, %v324, 0
        %v387 = vsel %vm352, %v325, 0
        %v390 = vsel %vm352, %v326, 0
        %v393 = vsel %vm352, %v327, 0
        %v396 = vsel %vm352, %v328, 0
        %v399 = vsel %vm352, %v329, 0
        %v402 = vsel %vm352, %v330, 0
        %v405 = vsel %vm352, %v331, 0
        %v408 = vsel %vm352, %v332, 0
        %v411 = vsel %vm352, %v333, 0
        %v414 = vsel %vm352, %v334, 0
        %v417 = vsel %vm352, %v335, 0
        %v420 = vsel %vm352, %v336, 0
        %v423 = vsel %vm352, %v337, 0
        %v426 = vsel %vm352, %v338, 0
        %v429 = vsel %vm352, %v339, 0
        %v432 = vsel %vm352, %v340, 0
        %v435 = vsel %vm352, %v341, 0
        %v438 = vsel %vm352, %v342, 0
        %v441 = vsel %vm352, %v343, 0
        %v444 = vsel %vm352, %v344, 0
        %v447 = vsel %vm352, %v345, 0
        %449 = vmatpush.msra.mxu0 0.0
        %450 = vmatpush.msra.mxu0 0.0
        %451 = vmatpush.msra.mxu0 0.0
        %452 = vmatpush.msra.mxu0 0.0
        %453 = vmatpush.msra.mxu0 0.0
        %454 = vmatpush.msra.mxu0 0.0
        %455 = vmatpush.msra.mxu0 0.0
        %456 = vmatpush.msra.mxu0 0.0
        %457 = vmatpush.msra.mxu0 0.0
        %458 = vmatpush.msra.mxu0 0.0
        %459 = vmatpush.msra.mxu0 0.0
        %460 = vmatpush.msra.mxu0 0.0
        %461 = vmatpush.msra.mxu0 0.0
        %462 = vmatpush.msra.mxu0 0.0
        %463 = vmatpush.msra.mxu0 %v347
        %464 = vmatpush.msra.mxu0 %v346
        %465 = vmatmul.f32.gmra.mxu0 %v354
        %v466 = vpop.f32.mrf.mxu0
        %v467 = vadd.f32 %v350, %v466
        %468 = vmatmul.f32.gmra.mxu0 %v357
        %v469 = vpop.f32.mrf.mxu0
        %v470 = vadd.f32 %v350, %v469
        %471 = vmatmul.f32.gmra.mxu0 %v360
        %v472 = vpop.f32.mrf.mxu0
        %v473 = vadd.f32 %v350, %v472
        %474 = vmatmul.f32.gmra.mxu0 %v363
        %v475 = vpop.f32.mrf.mxu0
        %v476 = vadd.f32 %v350, %v475
        %477 = vmatmul.f32.gmra.mxu0 %v366
        %v478 = vpop.f32.mrf.mxu0
        %v479 = vadd.f32 %v350, %v478
        %480 = vmatmul.f32.gmra.mxu0 %v369
        %v481 = vpop.f32.mrf.mxu0
        %v482 = vadd.f32 %v350, %v481
        %483 = vmatmul.f32.gmra.mxu0 %v372
        %v484 = vpop.f32.mrf.mxu0
        %v485 = vadd.f32 %v350, %v484
        %486 = vmatmul.f32.gmra.mxu0 %v375
        %v487 = vpop.f32.mrf.mxu0
        %v488 = vadd.f32 %v350, %v487
        %489 = vmatmul.f32.gmra.mxu0 %v378
        %v490 = vpop.f32.mrf.mxu0
        %v491 = vadd.f32 %v350, %v490
        %492 = vmatmul.f32.gmra.mxu0 %v381
        %v493 = vpop.f32.mrf.mxu0
        %v494 = vadd.f32 %v350, %v493
        %495 = vmatmul.f32.gmra.mxu0 %v384
        %v496 = vpop.f32.mrf.mxu0
        %v497 = vadd.f32 %v350, %v496
        %498 = vmatmul.f32.gmra.mxu0 %v387
        %v499 = vpop.f32.mrf.mxu0
        %v500 = vadd.f32 %v350, %v499
        %501 = vmatmul.f32.gmra.mxu0 %v390
        %v502 = vpop.f32.mrf.mxu0
        %v503 = vadd.f32 %v350, %v502
        %504 = vmatmul.f32.gmra.mxu0 %v393
        %v505 = vpop.f32.mrf.mxu0
        %v506 = vadd.f32 %v350, %v505
        %507 = vmatmul.f32.gmra.mxu0 %v396
        %v508 = vpop.f32.mrf.mxu0
        %v509 = vadd.f32 %v350, %v508
        %510 = vmatmul.f32.gmra.mxu0 %v399
        %v511 = vpop.f32.mrf.mxu0
        %v512 = vadd.f32 %v350, %v511
        %513 = vmatmul.f32.gmra.mxu0 %v402
        %v514 = vpop.f32.mrf.mxu0
        %v515 = vadd.f32 %v350, %v514
        %516 = vmatmul.f32.gmra.mxu0 %v405
        %v517 = vpop.f32.mrf.mxu0
        %v518 = vadd.f32 %v350, %v517
        %519 = vmatmul.f32.gmra.mxu0 %v408
        %v520 = vpop.f32.mrf.mxu0
        %v521 = vadd.f32 %v350, %v520
        %522 = vmatmul.f32.gmra.mxu0 %v411
        %v523 = vpop.f32.mrf.mxu0
        %v524 = vadd.f32 %v350, %v523
        %525 = vmatmul.f32.gmra.mxu0 %v414
        %v526 = vpop.f32.mrf.mxu0
        %v527 = vadd.f32 %v350, %v526
        %528 = vmatmul.f32.gmra.mxu0 %v417
        %v529 = vpop.f32.mrf.mxu0
        %v530 = vadd.f32 %v350, %v529
        %531 = vmatmul.f32.gmra.mxu0 %v420
        %v532 = vpop.f32.mrf.mxu0
        %v533 = vadd.f32 %v350, %v532
        %534 = vmatmul.f32.gmra.mxu0 %v423
        %v535 = vpop.f32.mrf.mxu0
        %v536 = vadd.f32 %v350, %v535
        %537 = vmatmul.f32.gmra.mxu0 %v426
        %v538 = vpop.f32.mrf.mxu0
        %v539 = vadd.f32 %v350, %v538
        %540 = vmatmul.f32.gmra.mxu0 %v429
        %v541 = vpop.f32.mrf.mxu0
        %v542 = vadd.f32 %v350, %v541
        %543 = vmatmul.f32.gmra.mxu0 %v432
        %v544 = vpop.f32.mrf.mxu0
        %v545 = vadd.f32 %v350, %v544
        %546 = vmatmul.f32.gmra.mxu0 %v435
        %v547 = vpop.f32.mrf.mxu0
        %v548 = vadd.f32 %v350, %v547
        %549 = vmatmul.f32.gmra.mxu0 %v438
        %v550 = vpop.f32.mrf.mxu0
        %v551 = vadd.f32 %v350, %v550
        %552 = vmatmul.f32.gmra.mxu0 %v441
        %v553 = vpop.f32.mrf.mxu0
        %v554 = vadd.f32 %v350, %v553
        %555 = vmatmul.f32.gmra.mxu0 %v444
        %v556 = vpop.f32.mrf.mxu0
        %v557 = vadd.f32 %v350, %v556
        %558 = vmatmul.f32.gmra.mxu0 %v447
        %v559 = vpop.f32.mrf.mxu0
        %v560 = vadd.f32 %v350, %v559
        %561 = vdwg.mxu0
        %562 = vst [vmem:[%s292] sm:$0xff] %v467
        %563 = vst [vmem:[%s292 + $0x8] sm:$0xff] %v470
        %564 = vst [vmem:[%s292 + $0x10] sm:$0xff] %v473
        %565 = vst [vmem:[%s292 + $0x18] sm:$0xff] %v476
        %566 = vst [vmem:[%s292 + $0x20] sm:$0xff] %v479
        %567 = vst [vmem:[%s292 + $0x28] sm:$0xff] %v482
        %568 = vst [vmem:[%s292 + $0x30] sm:$0xff] %v485
        %569 = vst [vmem:[%s292 + $0x38] sm:$0xff] %v488
        %570 = vst [vmem:[%s292 + $0x40] sm:$0xff] %v491
        %571 = vst [vmem:[%s292 + $0x48] sm:$0xff] %v494
        %572 = vst [vmem:[%s292 + $0x50] sm:$0xff] %v497
        %573 = vst [vmem:[%s292 + $0x58] sm:$0xff] %v500
        %574 = vst [vmem:[%s292 + $0x60] sm:$0xff] %v503
        %575 = vst [vmem:[%s292 + $0x68] sm:$0xff] %v506
        %576 = vst [vmem:[%s292 + $0x70] sm:$0xff] %v509
        %577 = vst [vmem:[%s292 + $0x78] sm:$0xff] %v512
        %578 = vst [vmem:[%s292 + $0x80] sm:$0xff] %v515
        %579 = vst [vmem:[%s292 + $0x88] sm:$0xff] %v518
        %580 = vst [vmem:[%s292 + $0x90] sm:$0xff] %v521
        %581 = vst [vmem:[%s292 + $0x98] sm:$0xff] %v524
        %582 = vst [vmem:[%s292 + $0xa0] sm:$0xff] %v527
        %583 = vst [vmem:[%s292 + $0xa8] sm:$0xff] %v530
        %584 = vst [vmem:[%s292 + $0xb0] sm:$0xff] %v533
        %585 = vst [vmem:[%s292 + $0xb8] sm:$0xff] %v536
        %586 = vst [vmem:[%s292 + $0xc0] sm:$0xff] %v539
        %587 = vst [vmem:[%s292 + $0xc8] sm:$0xff] %v542
        %588 = vst [vmem:[%s292 + $0xd0] sm:$0xff] %v545
        %589 = vst [vmem:[%s292 + $0xd8] sm:$0xff] %v548
        %590 = vst [vmem:[%s292 + $0xe0] sm:$0xff] %v551
        %591 = vst [vmem:[%s292 + $0xe8] sm:$0xff] %v554
        %592 = vst [vmem:[%s292 + $0xf0] sm:$0xff] %v557
        %593 = vst [vmem:[%s292 + $0xf8] sm:$0xff] %v560
        %v594 = vld [vmem:[%s310] sm:$0xff]
        %v595 = vld [vmem:[%s310 + $0x8] sm:$0xff]
        %v596 = vld [vmem:[%s310 + $0x10] sm:$0xff]
        %v597 = vld [vmem:[%s310 + $0x18] sm:$0xff]
        %v598 = vld [vmem:[%s310 + $0x20] sm:$0xff]
        %v599 = vld [vmem:[%s310 + $0x28] sm:$0xff]
        %v600 = vld [vmem:[%s310 + $0x30] sm:$0xff]
        %v601 = vld [vmem:[%s310 + $0x38] sm:$0xff]
        %v602 = vld [vmem:[%s310 + $0x40] sm:$0xff]
        %v603 = vld [vmem:[%s310 + $0x48] sm:$0xff]
        %v604 = vld [vmem:[%s310 + $0x50] sm:$0xff]
        %v605 = vld [vmem:[%s310 + $0x58] sm:$0xff]
        %v606 = vld [vmem:[%s310 + $0x60] sm:$0xff]
        %v607 = vld [vmem:[%s310 + $0x68] sm:$0xff]
        %v608 = vld [vmem:[%s310 + $0x70] sm:$0xff]
        %v609 = vld [vmem:[%s310 + $0x78] sm:$0xff]
        %v610 = vld [vmem:[%s3] sm:$0xff]
        %v611 = vld [vmem:[%s3 + $0x8] sm:$0xff]
        %v612 = vld [vmem:[%s3 + $0x10] sm:$0xff]
        %v613 = vld [vmem:[%s3 + $0x18] sm:$0xff]
        %v614 = vld [vmem:[%s3 + $0x20] sm:$0xff]
        %v615 = vld [vmem:[%s3 + $0x28] sm:$0xff]
        %v616 = vld [vmem:[%s5] sm:$0x1]
        %v618 = vperm.slane %v616, 0
        %vm620 = vcmask 392192
        %v622 = vsel %vm620, %v594, 0
        %v625 = vsel %vm620, %v595, 0
        %v628 = vsel %vm620, %v596, 0
        %v631 = vsel %vm620, %v597, 0
        %v634 = vsel %vm620, %v598, 0
        %v637 = vsel %vm620, %v599, 0
        %v640 = vsel %vm620, %v600, 0
        %v643 = vsel %vm620, %v601, 0
        %v646 = vsel %vm620, %v602, 0
        %v649 = vsel %vm620, %v603, 0
        %v652 = vsel %vm620, %v604, 0
        %v655 = vsel %vm620, %v605, 0
        %v658 = vsel %vm620, %v606, 0
        %v661 = vsel %vm620, %v607, 0
        %v664 = vsel %vm620, %v608, 0
        %v667 = vsel %vm620, %v609, 0
        %669 = vmatpush.msra.mxu0 0.0
        %670 = vmatpush.msra.mxu0 0.0
        %671 = vmatpush.msra.mxu0 0.0
        %672 = vmatpush.msra.mxu0 0.0
        %673 = vmatpush.msra.mxu0 0.0
        %674 = vmatpush.msra.mxu0 0.0
        %675 = vmatpush.msra.mxu0 0.0
        %676 = vmatpush.msra.mxu0 0.0
        %677 = vmatpush.msra.mxu0 0.0
        %678 = vmatpush.msra.mxu0 0.0
        %679 = vmatpush.msra.mxu0 %v615
        %680 = vmatpush.msra.mxu0 %v614
        %681 = vmatpush.msra.mxu0 %v613
        %682 = vmatpush.msra.mxu0 %v612
        %683 = vmatpush.msra.mxu0 %v611
        %684 = vmatpush.msra.mxu0 %v610
        %685 = vmatmul.f32.gmra.mxu0 %v622
        %v686 = vpop.f32.mrf.mxu0
        %v687 = vadd.f32 %v618, %v686
        %688 = vmatmul.f32.gmra.mxu0 %v625
        %v689 = vpop.f32.mrf.mxu0
        %v690 = vadd.f32 %v618, %v689
        %691 = vmatmul.f32.gmra.mxu0 %v628
        %v692 = vpop.f32.mrf.mxu0
        %v693 = vadd.f32 %v618, %v692
        %694 = vmatmul.f32.gmra.mxu0 %v631
        %v695 = vpop.f32.mrf.mxu0
        %v696 = vadd.f32 %v618, %v695
        %697 = vmatmul.f32.gmra.mxu0 %v634
        %v698 = vpop.f32.mrf.mxu0
        %v699 = vadd.f32 %v618, %v698
        %700 = vmatmul.f32.gmra.mxu0 %v637
        %v701 = vpop.f32.mrf.mxu0
        %v702 = vadd.f32 %v618, %v701
        %703 = vmatmul.f32.gmra.mxu0 %v640
        %v704 = vpop.f32.mrf.mxu0
        %v705 = vadd.f32 %v618, %v704
        %706 = vmatmul.f32.gmra.mxu0 %v643
        %v707 = vpop.f32.mrf.mxu0
        %v708 = vadd.f32 %v618, %v707
        %709 = vmatmul.f32.gmra.mxu0 %v646
        %v710 = vpop.f32.mrf.mxu0
        %v711 = vadd.f32 %v618, %v710
        %712 = vmatmul.f32.gmra.mxu0 %v649
        %v713 = vpop.f32.mrf.mxu0
        %v714 = vadd.f32 %v618, %v713
        %715 = vmatmul.f32.gmra.mxu0 %v652
        %v716 = vpop.f32.mrf.mxu0
        %v717 = vadd.f32 %v618, %v716
        %718 = vmatmul.f32.gmra.mxu0 %v655
        %v719 = vpop.f32.mrf.mxu0
        %v720 = vadd.f32 %v618, %v719
        %721 = vmatmul.f32.gmra.mxu0 %v658
        %v722 = vpop.f32.mrf.mxu0
        %v723 = vadd.f32 %v618, %v722
        %724 = vmatmul.f32.gmra.mxu0 %v661
        %v725 = vpop.f32.mrf.mxu0
        %v726 = vadd.f32 %v618, %v725
        %727 = vmatmul.f32.gmra.mxu0 %v664
        %v728 = vpop.f32.mrf.mxu0
        %v729 = vadd.f32 %v618, %v728
        %730 = vmatmul.f32.gmra.mxu0 %v667
        %v731 = vpop.f32.mrf.mxu0
        %v732 = vadd.f32 %v618, %v731
        %733 = vdwg.mxu0
        %734 = vst [vmem:[%s299] sm:$0xff] %v687
        %735 = vst [vmem:[%s299 + $0x8] sm:$0xff] %v690
        %736 = vst [vmem:[%s299 + $0x10] sm:$0xff] %v693
        %737 = vst [vmem:[%s299 + $0x18] sm:$0xff] %v696
        %738 = vst [vmem:[%s299 + $0x20] sm:$0xff] %v699
        %739 = vst [vmem:[%s299 + $0x28] sm:$0xff] %v702
        %740 = vst [vmem:[%s299 + $0x30] sm:$0xff] %v705
        %741 = vst [vmem:[%s299 + $0x38] sm:$0xff] %v708
        %742 = vst [vmem:[%s299 + $0x40] sm:$0xff] %v711
        %743 = vst [vmem:[%s299 + $0x48] sm:$0xff] %v714
        %744 = vst [vmem:[%s299 + $0x50] sm:$0xff] %v717
        %745 = vst [vmem:[%s299 + $0x58] sm:$0xff] %v720
        %746 = vst [vmem:[%s299 + $0x60] sm:$0xff] %v723
        %747 = vst [vmem:[%s299 + $0x68] sm:$0xff] %v726
        %748 = vst [vmem:[%s299 + $0x70] sm:$0xff] %v729
        %749 = vst [vmem:[%s299 + $0x78] sm:$0xff] %v732
        %s750 = sand.u32 %s169, 1
        %s751 = scalar_lea.sflag [#allocation3], %s750
        %s752 = sand.u32 %s169, 1
        %s753 = smul.addr %s752, 256
        %s754 = scalar_lea.vmem [#allocation2], %s753
        %s755 = sand.u32 %s195, 1
        %s756 = scalar_lea.sflag [#allocation5], %s755
        %s757 = sand.u32 %s195, 1
        %s758 = smul.addr %s757, 128
        %s759 = scalar_lea.vmem [#allocation4], %s758
        // Predicated region
        $region45: #{tpu_custom_call.1} parent=43 // pred_check
          %p760 = pneg %p179
        $region46: #{tpu_custom_call.1} parent=43 // pred_check_branch
          %762 = sbr.rel (%p760) target = $region48
        $region47: #{tpu_custom_call.1} parent=43 // pred_region
          %s763 = smul.u32 32, %s25
          %765 = vsyncadd %s751, 0
          %s766 = smul.addr %s763, 8
          %s767 = scalar_lea.hbm %s6, %s766
          %s768 = sshll.u32 %s754, 4
          %s769 = int_to_ptr.vmem [resolvable:$true] %s768
          %s770 = sshll.u32 %s767, 4
          %s771 = int_to_ptr.hbm [resolvable:$true] %s770
          %776 = dma.vmem_to_hbm [thread:$0]  %s769, 4096, %s771, %s751, 128, 128, 8
        $region48: #{tpu_custom_call.1} parent=43 // pred_fallthru
          _
        // Predicated region
        $region49: #{tpu_custom_call.1} parent=43 // pred_check
          %p777 = pneg %p205
        $region50: #{tpu_custom_call.1} parent=43 // pred_check_branch
          %779 = sbr.rel (%p777) target = $region52
        $region51: #{tpu_custom_call.1} parent=43 // pred_region
          %s780 = smul.u32 16, %s25
          %782 = vsyncadd %s756, 0
          %s783 = smul.addr %s780, 8
          %s784 = scalar_lea.hbm %s7, %s783
          %s785 = sshll.u32 %s759, 4
          %s786 = int_to_ptr.vmem [resolvable:$true] %s785
          %s787 = sshll.u32 %s784, 4
          %s788 = int_to_ptr.hbm [resolvable:$true] %s787
          %793 = dma.vmem_to_hbm [thread:$0]  %s786, 2048, %s788, %s756, 128, 128, 8
        $region52: #{tpu_custom_call.1} parent=43 // pred_fallthru
          _
      $region44: #{tpu_custom_call.1} parent=5 // pred_fallthru
        _
      %p794 = scmp.le.s32.totalorder 2, %s20
      // Predicated region
      $region53: #{tpu_custom_call.1} parent=5 // pred_check
        %p795 = pneg %p794
      $region54: #{tpu_custom_call.1} parent=5 // pred_check_branch
        %797 = sbr.rel (%p795) target = $region56
      $region55: #{tpu_custom_call.1} parent=5 // pred_region
        %s798 = ssub.s32 %s20, 2
        // Predicated region
        $region57: #{tpu_custom_call.1} parent=55 // pred_check
          %p799 = pneg %p185
        $region58: #{tpu_custom_call.1} parent=55 // pred_check_branch
          %801 = sbr.rel (%p799) target = $region60
        $region59: #{tpu_custom_call.1} parent=55 // pred_region
          %s802 = sand.u32 %s170, 1
          %s803 = scalar_lea.sflag [#allocation3], %s802
          %s804 = sand.u32 %s170, 1
          %s805 = smul.addr %s804, 256
          %s806 = scalar_lea.vmem [#allocation2], %s805
          %808 = dma.done %s803, 4096
        $region60: #{tpu_custom_call.1} parent=55 // pred_fallthru
          _
        // Predicated region
        $region61: #{tpu_custom_call.1} parent=55 // pred_check
          %p809 = pneg %p211
        $region62: #{tpu_custom_call.1} parent=55 // pred_check_branch
          %811 = sbr.rel (%p809) target = $region64
        $region63: #{tpu_custom_call.1} parent=55 // pred_region
          %s812 = sand.u32 %s196, 1
          %s813 = scalar_lea.sflag [#allocation5], %s812
          %s814 = sand.u32 %s196, 1
          %s815 = smul.addr %s814, 128
          %s816 = scalar_lea.vmem [#allocation4], %s815
          %818 = dma.done %s813, 2048
        $region64: #{tpu_custom_call.1} parent=55 // pred_fallthru
          _
      $region56: #{tpu_custom_call.1} parent=5 // pred_fallthru
        _
    $region6: #{tpu_custom_call.1} parent=1 // loop_footer
      %s24 = sadd.s32 1, %s20
    $region7: #{tpu_custom_call.1} parent=1 // loop_footer_branch
      %19 = sbr.rel target = $region3
    $region8: #{tpu_custom_call.1} parent=1 // loop_exit
      _
    %819 = vsyncpa [#allocation3], 1
    %s820 = scalar_lea.sflag [#allocation3], 1
    %821 = vsyncpa %s820, 1
    %822 = vsyncpa [#allocation5], 1
    %s823 = scalar_lea.sflag [#allocation5], 1
    %824 = vsyncpa %s823, 1

</llo_original>
